<compile_context>
chip_gen: v7x
topology: tpu7x:2x2x1
jax: 0.10.0
libtpu: 0.0.40
codegen_flags: <defaults>
</compile_context>

<pallas_src>
import functools

import jax
import jax.numpy as jnp
from jax.experimental import pallas as pl
from jax.experimental.pallas import tpu as pltpu

_LANE = 128
_DEFAULT_TILE_L = 8192
_MAX_TILE_L = 32768  # bounds the static unroll of the per-tile lane accumulation


def _round_up(n, m):
    return ((n + m - 1) // m) * m


def _default_vmem_limit():
    """Generation-aware VMEM limit: 48 MiB on v7x (64 MiB/TC), 64 MiB on v5e/v6e."""
    cap = None
    try:
        cap = getattr(pltpu.get_tpu_info(), "vmem_capacity_bytes", None)
    except Exception:
        cap = None
    if not cap:
        cap = 64 * 1024 * 1024  # conservative fallback: v7x per-TC VMEM
    return int(min(max(cap - 16 * 1024 * 1024, 16 * 1024 * 1024), 64 * 1024 * 1024))


def _pick_tile_l(requested, batch, channels, length, itemsize, vmem_limit_bytes):
    """Pick an L-tile: as large as the VMEM budget allows, single-step if possible."""
    l_pad = _round_up(length, _LANE)
    # ~60% of the limit for the double-buffered x tile; the rest covers the resident
    # weights, the two (B, C, 128) scratch accumulators, the output and headroom.
    x_budget = int(vmem_limit_bytes * 0.6)
    max_tile_l = (x_budget // (2 * batch * channels * itemsize)) // _LANE * _LANE
    max_tile_l = max(_LANE, min(max_tile_l, _MAX_TILE_L))
    if requested is None:
        if l_pad <= max_tile_l:
            return l_pad  # whole (padded) input in ONE grid step
        requested = _DEFAULT_TILE_L
    tile_l = _round_up(max(int(requested), _LANE), _LANE)
    return max(_LANE, min(tile_l, max_tile_l, l_pad))


def _lane_tree_reduce(x, op):
    """Reduce (B, C, tile_l) -> (B, C, 128) with static 128-aligned lane slices.

    Each slice is a free vreg selection (no relayout); the pairwise tree keeps the
    whole per-tile reduction on the VPU with a short dependency chain.
    """
    n_sub = x.shape[-1] // _LANE
    parts = [x[:, :, k * _LANE:(k + 1) * _LANE] for k in range(n_sub)]
    while len(parts) > 1:
        nxt = [op(parts[i], parts[i + 1]) for i in range(0, len(parts) - 1, 2)]
        if len(parts) % 2:
            nxt.append(parts[-1])
        parts = nxt
    return parts[0]


def _channel_attention_kernel(x_ref, w1t_ref, w2t_ref, o_ref, psum_ref, pmax_ref,
                              *, batch, channels, tile_l, total_l, needs_mask):
    # x_ref   : (B, C, TILE_L)  current L-tile of the input
    # w1t_ref : (C, H)          fc1 weight, pre-transposed in the wrapper
    # w2t_ref : (H, C)          fc2 weight, pre-transposed in the wrapper
    # o_ref   : (B, C)          sigmoid(channel attention); reshaped to (B, C, 1) outside
    # psum/pmax: (B, C, 128)    lane-resident partial sum / partial max accumulators
    l = pl.program_id(0)
    num_l = pl.num_programs(0)

    # ---- init running accumulators on the first L-tile ----------------------
    @pl.when(l == 0)
    def _():
        psum_ref[...] = jnp.zeros(psum_ref.shape, psum_ref.dtype)
        pmax_ref[...] = jnp.full(pmax_ref.shape, -jnp.inf, pmax_ref.dtype)

    x = x_ref[...].astype(jnp.float32)                      # (B, C, TILE_L)

    def accumulate(x_sum, x_max):
        # One RMW of each scratch accumulator per tile.
        psum_ref[...] += _lane_tree_reduce(x_sum, jnp.add)
        pmax_ref[...] = jnp.maximum(pmax_ref[...],
                                    _lane_tree_reduce(x_max, jnp.maximum))

    if needs_mask:
        # Only the LAST tile contains the (padded / OOB) remainder region; full
        # tiles take the unmasked pure-VPU path.
        @pl.when(l == num_l - 1)
        def _():
            lane = jax.lax.broadcasted_iota(jnp.int32, (batch, channels, tile_l), 2)
            valid = (l * tile_l + lane) < total_l
            accumulate(jnp.where(valid, x, 0.0), jnp.where(valid, x, -jnp.inf))

        @pl.when(l < num_l - 1)
        def _():
            accumulate(x, x)
    else:
        accumulate(x, x)

    # ---- finalize: pool -> fc1 -> relu -> (+) -> fc2 -> sigmoid --------------
    @pl.when(l == num_l - 1)
    def _():
        avg = jnp.sum(psum_ref[...], axis=-1) * (1.0 / total_l)        # (B, C)
        mx = jnp.max(pmax_ref[...], axis=-1)                           # (B, C)
        w1t = w1t_ref[...].astype(jnp.float32)                         # (C, H)
        w2t = w2t_ref[...].astype(jnp.float32)                         # (H, C)
        # fc2 is linear, so fc2(relu(fc1(avg))) + fc2(relu(fc1(mx)))
        #                == fc2(relu(fc1(avg)) + relu(fc1(mx)))  -- no axis-0 concat.
        h = (jnp.maximum(jnp.dot(avg, w1t, preferred_element_type=jnp.float32), 0.0)
             + jnp.maximum(jnp.dot(mx, w1t, preferred_element_type=jnp.float32), 0.0))
        y = jnp.dot(h, w2t, preferred_element_type=jnp.float32)        # (B, C)
        o_ref[...] = jax.nn.sigmoid(y).astype(o_ref.dtype)


def channel_attention(x, w_fc1, w_fc2, *, tile_l=None, vmem_limit_bytes=None):
    """x: (B, C, L), w_fc1: (H, C, 1), w_fc2: (C, H, 1). Returns (B, C, 1)."""
    B, C, L = x.shape
    H = w_fc1.shape[0]
    itemsize = jnp.dtype(x.dtype).itemsize

    # Pre-transpose the 1x1-conv weights once in the wrapper (layout plumbing only).
    w1t = w_fc1.reshape(H, C).T                    # (C, H)
    w2t = w_fc2.reshape(C, H).T                    # (H, C)

    if vmem_limit_bytes is None:
        vmem_limit_bytes = _default_vmem_limit()

    tile_l = _pick_tile_l(tile_l, B, C, L, itemsize, vmem_limit_bytes)
    num_tiles = pl.cdiv(L, tile_l)
    needs_mask = (L % tile_l) != 0

    kernel = functools.partial(
        _channel_attention_kernel,
        batch=B, channels=C, tile_l=tile_l, total_l=L, needs_mask=needs_mask)

    out2d = pl.pallas_call(
        kernel,
        out_shape=jax.ShapeDtypeStruct((B, C), x.dtype),
        grid=(num_tiles,),
        in_specs=[
            pl.BlockSpec((B, C, tile_l), lambda l: (0, 0, l)),   # stream L-tiles
            pl.BlockSpec((C, H), lambda l: (0, 0)),              # resident weights
            pl.BlockSpec((H, C), lambda l: (0, 0)),
        ],
        out_specs=pl.BlockSpec((B, C), lambda l: (0, 0)),        # resident output
        scratch_shapes=[
            pltpu.VMEM((B, C, _LANE), jnp.float32),              # partial sums
            pltpu.VMEM((B, C, _LANE), jnp.float32),              # partial maxes
        ],
        compiler_params=pltpu.CompilerParams(
            dimension_semantics=("arbitrary",),                  # L is a reduction axis
            vmem_limit_bytes=int(vmem_limit_bytes),
        ),
        cost_estimate=pl.CostEstimate(
            flops=2 * B * C * L + 6 * B * C * H,
            transcendentals=B * C,
            bytes_accessed=B * C * L * itemsize + (2 * C * H + B * C) * 4,
        ),
    )(x, w1t, w2t)

    return out2d.reshape(B, C, 1)


def channel_attention_ref(x, w_fc1, w_fc2):
    """Pure-JAX reference mirroring the PyTorch forward (Conv1d bias=False)."""
    H, C = w_fc1.shape[0], w_fc1.shape[1]
    w1 = w_fc1.reshape(H, C)
    w2 = w_fc2.reshape(C, H)
    avg = jnp.mean(x, axis=-1)                     # (B, C)
    mx = jnp.max(x, axis=-1)                       # (B, C)
    avg_out = jnp.maximum(avg @ w1.T, 0.0) @ w2.T
    max_out = jnp.maximum(mx @ w1.T, 0.0) @ w2.T
    return jax.nn.sigmoid(avg_out + max_out)[..., None]


if __name__ == "__main__":
    # Shapes consistent with the module: in_planes=16, ratio=4 -> hidden=4.
    B, C, ratio = 2, 16, 4
    H = C // ratio

    key = jax.random.PRNGKey(0)
    kx1, kx2, kx3, k1, k2 = jax.random.split(key, 5)

    # Deterministic init mimicking PyTorch Conv1d default (uniform +/- 1/sqrt(fan_in)).
    bound1 = 1.0 / (C ** 0.5)
    bound2 = 1.0 / (H ** 0.5)
    w_fc1 = jax.random.uniform(k1, (H, C, 1), jnp.float32, -bound1, bound1)
    w_fc2 = jax.random.uniform(k2, (C, H, 1), jnp.float32, -bound2, bound2)

    # Case 1: L multiple of 128 -> single grid step, no masking.
    L1 = 512
    x1 = jax.random.normal(kx1, (B, C, L1), dtype=jnp.float32)
    out1 = channel_attention(x1, w_fc1, w_fc2)
    jax.block_until_ready(out1)
    ref1 = channel_attention_ref(x1, w_fc1, w_fc2)
    assert out1.shape == (B, C, 1)
    assert jnp.allclose(out1, ref1, atol=1e-5, rtol=1e-5), "mismatch vs reference (L=512)"

    # Case 2: L NOT a multiple of 128 -> single padded grid step, masked tail.
    L2 = 320
    x2 = jax.random.normal(kx2, (B, C, L2), dtype=jnp.float32)
    out2 = channel_attention(x2, w_fc1, w_fc2)
    jax.block_until_ready(out2)
    ref2 = channel_attention_ref(x2, w_fc1, w_fc2)
    assert out2.shape == (B, C, 1)
    assert jnp.allclose(out2, ref2, atol=1e-5, rtol=1e-5), "mismatch vs reference (L=320)"

    # Case 3: explicit small tile -> multi-step streaming path, only LAST tile masked.
    L3 = 640
    x3 = jax.random.normal(kx3, (B, C, L3), dtype=jnp.float32)
    out3 = channel_attention(x3, w_fc1, w_fc2, tile_l=256)
    jax.block_until_ready(out3)
    ref3 = channel_attention_ref(x3, w_fc1, w_fc2)
    assert out3.shape == (B, C, 1)
    assert jnp.allclose(out3, ref3, atol=1e-5, rtol=1e-5), "mismatch vs reference (L=640)"

    print("KERNEL_OK")
</pallas_src>

<mosaic_0001>
module attributes {stable_mosaic.version = 11 : i64} {
  func.func @_channel_attention_kernel(%arg0: i32, %arg1: memref<2x16x512xf32, #tpu.memory_space<vmem>>, %arg2: memref<16x4xf32, #tpu.memory_space<vmem>>, %arg3: memref<4x16xf32, #tpu.memory_space<vmem>>, %arg4: memref<2x16xf32, #tpu.memory_space<vmem>>, %arg5: memref<2x16x128xf32, #tpu.memory_space<vmem>>, %arg6: memref<2x16x128xf32, #tpu.memory_space<vmem>>) attributes {dimension_semantics = [#tpu.dimension_semantics<arbitrary>], iteration_bounds = array<i64: 1>, scalar_prefetch = 0 : i64, scratch_operands = 2 : i64, tpu.core_type = #tpu.core_type<tc>, window_params = [{transform_indices = @transform_0, window_bounds = array<i64: 2, 16, 512>}, {pipeline_mode = #tpu.pipeline_mode<synchronous>, transform_indices = @transform_1, window_bounds = array<i64: 16, 4>}, {pipeline_mode = #tpu.pipeline_mode<synchronous>, transform_indices = @transform_2, window_bounds = array<i64: 4, 16>}, {pipeline_mode = #tpu.pipeline_mode<synchronous>, transform_indices = @transform_3, window_bounds = array<i64: 2, 16>}]} {
    %c0_i32 = arith.constant 0 : i32
    %0 = arith.cmpi eq, %arg0, %c0_i32 : i32
    %1 = arith.extui %0 : i1 to i32
    %c0_i32_0 = arith.constant 0 : i32
    %2 = arith.cmpi ne, %1, %c0_i32_0 : i32
    scf.if %2 {
      %cst = arith.constant 0.000000e+00 : f32
      %27 = vector.broadcast %cst : f32 to vector<2x16x128xf32>
      %c0_17 = arith.constant 0 : index
      %c0_18 = arith.constant 0 : index
      %c0_19 = arith.constant 0 : index
      %28 = vector.load %arg5[%c0_17, %c0_18, %c0_19] : memref<2x16x128xf32, #tpu.memory_space<vmem>>, vector<2x16x128xf32>
      tpu.vector_store %arg5[%c0_17, %c0_18, %c0_19], %27 {strides = array<i32>} : memref<2x16x128xf32, #tpu.memory_space<vmem>>, vector<2x16x128xf32>,
      %cst_20 = arith.constant 0xFF800000 : f32
      %29 = vector.broadcast %cst_20 : f32 to vector<2x16x128xf32>
      %c0_21 = arith.constant 0 : index
      %c0_22 = arith.constant 0 : index
      %c0_23 = arith.constant 0 : index
      %30 = vector.load %arg6[%c0_21, %c0_22, %c0_23] : memref<2x16x128xf32, #tpu.memory_space<vmem>>, vector<2x16x128xf32>
      tpu.vector_store %arg6[%c0_21, %c0_22, %c0_23], %29 {strides = array<i32>} : memref<2x16x128xf32, #tpu.memory_space<vmem>>, vector<2x16x128xf32>,
    } else {
    }
    %c0 = arith.constant 0 : index
    %c0_1 = arith.constant 0 : index
    %c0_2 = arith.constant 0 : index
    %3 = vector.load %arg1[%c0, %c0_1, %c0_2] : memref<2x16x512xf32, #tpu.memory_space<vmem>>, vector<2x16x512xf32>
    %c0_3 = arith.constant 0 : index
    %c0_4 = arith.constant 0 : index
    %c0_5 = arith.constant 0 : index
    %4 = vector.load %arg5[%c0_3, %c0_4, %c0_5] : memref<2x16x128xf32, #tpu.memory_space<vmem>>, vector<2x16x128xf32>
    %5 = vector.extract_strided_slice %3 {offsets = [0, 0, 0], sizes = [2, 16, 128], strides = [1, 1, 1]} : vector<2x16x512xf32> to vector<2x16x128xf32>
    %6 = vector.extract_strided_slice %3 {offsets = [0, 0, 128], sizes = [2, 16, 128], strides = [1, 1, 1]} : vector<2x16x512xf32> to vector<2x16x128xf32>
    %7 = vector.extract_strided_slice %3 {offsets = [0, 0, 256], sizes = [2, 16, 128], strides = [1, 1, 1]} : vector<2x16x512xf32> to vector<2x16x128xf32>
    %8 = vector.extract_strided_slice %3 {offsets = [0, 0, 384], sizes = [2, 16, 128], strides = [1, 1, 1]} : vector<2x16x512xf32> to vector<2x16x128xf32>
    %9 = arith.addf %5, %6 : vector<2x16x128xf32>
    %10 = arith.addf %7, %8 : vector<2x16x128xf32>
    %11 = arith.addf %9, %10 : vector<2x16x128xf32>
    %12 = arith.addf %4, %11 : vector<2x16x128xf32>
    %c0_6 = arith.constant 0 : index
    %c0_7 = arith.constant 0 : index
    %c0_8 = arith.constant 0 : index
    %13 = vector.load %arg5[%c0_6, %c0_7, %c0_8] : memref<2x16x128xf32, #tpu.memory_space<vmem>>, vector<2x16x128xf32>
    tpu.vector_store %arg5[%c0_6, %c0_7, %c0_8], %12 {strides = array<i32>} : memref<2x16x128xf32, #tpu.memory_space<vmem>>, vector<2x16x128xf32>,
    %c0_9 = arith.constant 0 : index
    %c0_10 = arith.constant 0 : index
    %c0_11 = arith.constant 0 : index
    %14 = vector.load %arg6[%c0_9, %c0_10, %c0_11] : memref<2x16x128xf32, #tpu.memory_space<vmem>>, vector<2x16x128xf32>
    %15 = vector.extract_strided_slice %3 {offsets = [0, 0, 0], sizes = [2, 16, 128], strides = [1, 1, 1]} : vector<2x16x512xf32> to vector<2x16x128xf32>
    %16 = vector.extract_strided_slice %3 {offsets = [0, 0, 128], sizes = [2, 16, 128], strides = [1, 1, 1]} : vector<2x16x512xf32> to vector<2x16x128xf32>
    %17 = vector.extract_strided_slice %3 {offsets = [0, 0, 256], sizes = [2, 16, 128], strides = [1, 1, 1]} : vector<2x16x512xf32> to vector<2x16x128xf32>
    %18 = vector.extract_strided_slice %3 {offsets = [0, 0, 384], sizes = [2, 16, 128], strides = [1, 1, 1]} : vector<2x16x512xf32> to vector<2x16x128xf32>
    %19 = arith.maximumf %15, %16 : vector<2x16x128xf32>
    %20 = arith.maximumf %17, %18 : vector<2x16x128xf32>
    %21 = arith.maximumf %19, %20 : vector<2x16x128xf32>
    %22 = arith.maximumf %14, %21 : vector<2x16x128xf32>
    %c0_12 = arith.constant 0 : index
    %c0_13 = arith.constant 0 : index
    %c0_14 = arith.constant 0 : index
    %23 = vector.load %arg6[%c0_12, %c0_13, %c0_14] : memref<2x16x128xf32, #tpu.memory_space<vmem>>, vector<2x16x128xf32>
    tpu.vector_store %arg6[%c0_12, %c0_13, %c0_14], %22 {strides = array<i32>} : memref<2x16x128xf32, #tpu.memory_space<vmem>>, vector<2x16x128xf32>,
    %c0_i32_15 = arith.constant 0 : i32
    %24 = arith.cmpi eq, %arg0, %c0_i32_15 : i32
    %25 = arith.extui %24 : i1 to i32
    %c0_i32_16 = arith.constant 0 : i32
    %26 = arith.cmpi ne, %25, %c0_i32_16 : i32
    scf.if %26 {
      %c0_17 = arith.constant 0 : index
      %c0_18 = arith.constant 0 : index
      %c0_19 = arith.constant 0 : index
      %27 = vector.load %arg5[%c0_17, %c0_18, %c0_19] : memref<2x16x128xf32, #tpu.memory_space<vmem>>, vector<2x16x128xf32>
      %cst = arith.constant dense<0.000000e+00> : vector<2x16xf32>
      %28 = vector.multi_reduction <add>, %27, %cst [2] : vector<2x16x128xf32> to vector<2x16xf32>
      %cst_20 = arith.constant 0.001953125 : f32
      %29 = vector.broadcast %cst_20 : f32 to vector<2x16xf32>
      %30 = arith.mulf %28, %29 : vector<2x16xf32>
      %c0_21 = arith.constant 0 : index
      %c0_22 = arith.constant 0 : index
      %c0_23 = arith.constant 0 : index
      %31 = vector.load %arg6[%c0_21, %c0_22, %c0_23] : memref<2x16x128xf32, #tpu.memory_space<vmem>>, vector<2x16x128xf32>
      %cst_24 = arith.constant dense<0xFF800000> : vector<2x16xf32>
      %32 = vector.multi_reduction <maximumf>, %31, %cst_24 [2] : vector<2x16x128xf32> to vector<2x16xf32>
      %c0_25 = arith.constant 0 : index
      %c0_26 = arith.constant 0 : index
      %33 = vector.load %arg2[%c0_25, %c0_26] : memref<16x4xf32, #tpu.memory_space<vmem>>, vector<16x4xf32>
      %c0_27 = arith.constant 0 : index
      %c0_28 = arith.constant 0 : index
      %34 = vector.load %arg3[%c0_27, %c0_28] : memref<4x16xf32, #tpu.memory_space<vmem>>, vector<4x16xf32>
      %cst_29 = arith.constant dense<0.000000e+00> : vector<2x4xf32>
      %35 = tpu.matmul %30, %33, %cst_29 {dimension_numbers = #tpu.dot_dimension_numbers<[1], [0], [0], [1], [0, 0, 1, 1], [], []>} : vector<2x16xf32>, vector<16x4xf32>, vector<2x4xf32> -> vector<2x4xf32>
      %cst_30 = arith.constant 0.000000e+00 : f32
      %36 = vector.broadcast %cst_30 : f32 to vector<2x4xf32>
      %37 = arith.maximumf %35, %36 : vector<2x4xf32>
      %cst_31 = arith.constant dense<0.000000e+00> : vector<2x4xf32>
      %38 = tpu.matmul %32, %33, %cst_31 {dimension_numbers = #tpu.dot_dimension_numbers<[1], [0], [0], [1], [0, 0, 1, 1], [], []>} : vector<2x16xf32>, vector<16x4xf32>, vector<2x4xf32> -> vector<2x4xf32>
      %cst_32 = arith.constant 0.000000e+00 : f32
      %39 = vector.broadcast %cst_32 : f32 to vector<2x4xf32>
      %40 = arith.maximumf %38, %39 : vector<2x4xf32>
      %41 = arith.addf %37, %40 : vector<2x4xf32>
      %cst_33 = arith.constant dense<0.000000e+00> : vector<2x16xf32>
      %42 = tpu.matmul %41, %34, %cst_33 {dimension_numbers = #tpu.dot_dimension_numbers<[1], [0], [0], [1], [0, 0, 1, 1], [], []>} : vector<2x4xf32>, vector<4x16xf32>, vector<2x16xf32> -> vector<2x16xf32>
      %43 = arith.negf %42 : vector<2x16xf32>
      %44 = math.exp %43 : vector<2x16xf32>
      %cst_34 = arith.constant 1.000000e+00 : f32
      %45 = vector.broadcast %cst_34 : f32 to vector<2x16xf32>
      %46 = arith.addf %45, %44 : vector<2x16xf32>
      %47 = arith.divf %45, %46 : vector<2x16xf32>
      %c0_35 = arith.constant 0 : index
      %c0_36 = arith.constant 0 : index
      %48 = vector.load %arg4[%c0_35, %c0_36] : memref<2x16xf32, #tpu.memory_space<vmem>>, vector<2x16xf32>
      tpu.vector_store %arg4[%c0_35, %c0_36], %47 {strides = array<i32>} : memref<2x16xf32, #tpu.memory_space<vmem>>, vector<2x16xf32>,
    } else {
    }
    return
  }
  func.func @transform_0(%arg0: i32) -> (i32, i32, i32) {
    %c0_i32 = arith.constant 0 : i32
    %c0_i32_0 = arith.constant 0 : i32
    %c0_i32_1 = arith.constant 0 : i32
    return %c0_i32, %c0_i32_0, %arg0 : i32, i32, i32
  }
  func.func @transform_1(%arg0: i32) -> (i32, i32) {
    %c0_i32 = arith.constant 0 : i32
    %c0_i32_0 = arith.constant 0 : i32
    %c0_i32_1 = arith.constant 0 : i32
    return %c0_i32, %c0_i32_0 : i32, i32
  }
  func.func @transform_2(%arg0: i32) -> (i32, i32) {
    %c0_i32 = arith.constant 0 : i32
    %c0_i32_0 = arith.constant 0 : i32
    %c0_i32_1 = arith.constant 0 : i32
    return %c0_i32, %c0_i32_0 : i32, i32
  }
  func.func @transform_3(%arg0: i32) -> (i32, i32) {
    %c0_i32 = arith.constant 0 : i32
    %c0_i32_0 = arith.constant 0 : i32
    %c0_i32_1 = arith.constant 0 : i32
    return %c0_i32, %c0_i32_0 : i32, i32
  }
}

</mosaic_0001>

<llo_original>
// kernel: tpu_custom_call.1
$region0: #{tpu_custom_call.1}
  #allocation0 [shape = 'u32[]', space=smem, size = 0x4, offset = 0x4, fixed_abs, tag = 'smem constant byte address 0x4 - core index']
  #allocation1 [shape = 'u32[144,128]{1,0:T(1,128)}', space=vmem, size = 0x12000, scoped, tag = 'internal scratch']
  #allocation2 [shape = 'f32[2,16,128]{2,1,0:T(8,128)}', space=vmem, size = 0x4000, scoped, tag = 'scratch operand']
  #allocation3 [shape = 'f32[2,16,128]{2,1,0:T(8,128)}', space=vmem, size = 0x4000, scoped, tag = 'scratch operand']
  %s0 = inlined_call_operand.hbm [shape: f32[2,16,512], index: 0, kind: input, shape index: {}]
  %s1 = inlined_call_operand.vmem [shape: f32[16,4], index: 1, kind: input, shape index: {}]
  %s2 = inlined_call_operand.vmem [shape: f32[4,16], index: 2, kind: input, shape index: {}]
  %s3 = inlined_call_operand.hbm [shape: f32[2,16], index: 3, kind: output, shape index: {}]
  %s4 = sld [smem:[#allocation0]]
  $region34: #{tpu_custom_call.1} parent=0
    _
  %s6 = ssub.s32 1, %s4
  %s7 = scalar_select 0, %s6, %s4
  $region1: #{tpu_custom_call.1} parent=0
    #allocation4 [shape = 'u8[65536]{0}', space=vmem, size = 0x10000, scoped, tag = 'input window, operand 0, single buffered']
    #allocation5 [shape = 's32[1]{0}', space=sflag, size = 0x4, scoped, tag = 'scoped memory for tpu_custom_call.1']
    #allocation6 [shape = 's32[1]{0}', space=sflag, size = 0x4, scoped, tag = 'scoped memory for tpu_custom_call.1']
    #allocation7 [shape = 'u8[1024]{0}', space=vmem, size = 0x400, scoped, tag = 'output window, operand 0, single buffered']
    %8 = vsyncpa [#allocation5], 0
    %9 = vsyncpa [#allocation6], 0
    // Predicated region
    $region2: #{tpu_custom_call.1} parent=1 // pred_check
      _
    $region3: #{tpu_custom_call.1} parent=1 // pred_check_branch
      %11 = sbr.rel (0) target = $region5
    $region4: #{tpu_custom_call.1} parent=1 // pred_region
      %s13 = ssub.s32 2048, 2048
      %14 = vsyncadd [#allocation5], %s13
      %s15 = sshll.u32 [#allocation4], 4
      %s16 = int_to_ptr.vmem [resolvable:$true] %s15
      %21 = dma.hbm_to_vmem [thread:$0]  %s0, 2048, %s16, [#allocation5], 512, 512, 32
    $region5: #{tpu_custom_call.1} parent=1 // pred_fallthru
      _
    // Predicated region
    $region6: #{tpu_custom_call.1} parent=1 // pred_check
      _
    $region7: #{tpu_custom_call.1} parent=1 // pred_check_branch
      %23 = sbr.rel (0) target = $region9
    $region8: #{tpu_custom_call.1} parent=1 // pred_region
      _
    $region9: #{tpu_custom_call.1} parent=1 // pred_fallthru
      _
    // Predicated region
    $region10: #{tpu_custom_call.1} parent=1 // pred_check
      _
    $region11: #{tpu_custom_call.1} parent=1 // pred_check_branch
      %25 = sbr.rel (0) target = $region13
    $region12: #{tpu_custom_call.1} parent=1 // pred_region
      _
    $region13: #{tpu_custom_call.1} parent=1 // pred_fallthru
      _
    // Predicated region
    $region14: #{tpu_custom_call.1} parent=1 // pred_check
      _
    $region15: #{tpu_custom_call.1} parent=1 // pred_check_branch
      %27 = sbr.rel (0) target = $region17
    $region16: #{tpu_custom_call.1} parent=1 // pred_region
      %28 = dma.done [#allocation5], 2048
    $region17: #{tpu_custom_call.1} parent=1 // pred_fallthru
      _
    %p29 = scmp.eq.s32.totalorder 0, 0
    // Predicated region
    $region18: #{tpu_custom_call.1} parent=1 // pred_check
      %p30 = pneg %p29
    $region19: #{tpu_custom_call.1} parent=1 // pred_check_branch
      %32 = sbr.rel (%p30) target = $region21
    $region20: #{tpu_custom_call.1} parent=1 // pred_region
      %33 = vst [vmem:[#allocation2] sm:$0xff] 0.0
      %34 = vst [vmem:[#allocation2 + $0x8] sm:$0xff] 0.0
      %35 = vst [vmem:[#allocation2 + $0x10] sm:$0xff] 0.0
      %36 = vst [vmem:[#allocation2 + $0x18] sm:$0xff] 0.0
      %37 = vst [vmem:[#allocation3] sm:$0xff] -inf
      %38 = vst [vmem:[#allocation3 + $0x8] sm:$0xff] -inf
      %39 = vst [vmem:[#allocation3 + $0x10] sm:$0xff] -inf
      %40 = vst [vmem:[#allocation3 + $0x18] sm:$0xff] -inf
    $region21: #{tpu_custom_call.1} parent=1 // pred_fallthru
      _
    %v41 = vld [vmem:[#allocation4] sm:$0xff]
    %v42 = vld [vmem:[#allocation4 + $0x8] sm:$0xff]
    %v43 = vld [vmem:[#allocation4 + $0x10] sm:$0xff]
    %v44 = vld [vmem:[#allocation4 + $0x18] sm:$0xff]
    %v45 = vld [vmem:[#allocation4 + $0x20] sm:$0xff]
    %v46 = vld [vmem:[#allocation4 + $0x28] sm:$0xff]
    %v47 = vld [vmem:[#allocation4 + $0x30] sm:$0xff]
    %v48 = vld [vmem:[#allocation4 + $0x38] sm:$0xff]
    %v49 = vld [vmem:[#allocation4 + $0x40] sm:$0xff]
    %v50 = vld [vmem:[#allocation4 + $0x48] sm:$0xff]
    %v51 = vld [vmem:[#allocation4 + $0x50] sm:$0xff]
    %v52 = vld [vmem:[#allocation4 + $0x58] sm:$0xff]
    %v53 = vld [vmem:[#allocation4 + $0x60] sm:$0xff]
    %v54 = vld [vmem:[#allocation4 + $0x68] sm:$0xff]
    %v55 = vld [vmem:[#allocation4 + $0x70] sm:$0xff]
    %v56 = vld [vmem:[#allocation4 + $0x78] sm:$0xff]
    %v57 = vld [vmem:[#allocation2] sm:$0xff]
    %v58 = vld [vmem:[#allocation2 + $0x8] sm:$0xff]
    %v59 = vld [vmem:[#allocation2 + $0x10] sm:$0xff]
    %v60 = vld [vmem:[#allocation2 + $0x18] sm:$0xff]
    %v61 = vadd.f32 %v41, %v42
    %v62 = vadd.f32 %v45, %v46
    %v63 = vadd.f32 %v49, %v50
    %v64 = vadd.f32 %v53, %v54
    %v65 = vadd.f32 %v43, %v44
    %v66 = vadd.f32 %v47, %v48
    %v67 = vadd.f32 %v51, %v52
    %v68 = vadd.f32 %v55, %v56
    %v69 = vadd.f32 %v61, %v65
    %v70 = vadd.f32 %v62, %v66
    %v71 = vadd.f32 %v63, %v67
    %v72 = vadd.f32 %v64, %v68
    %v73 = vadd.f32 %v57, %v69
    %v74 = vadd.f32 %v58, %v70
    %v75 = vadd.f32 %v59, %v71
    %v76 = vadd.f32 %v60, %v72
    %77 = vst [vmem:[#allocation2] sm:$0xff] %v73
    %78 = vst [vmem:[#allocation2 + $0x8] sm:$0xff] %v74
    %79 = vst [vmem:[#allocation2 + $0x10] sm:$0xff] %v75
    %80 = vst [vmem:[#allocation2 + $0x18] sm:$0xff] %v76
    %v81 = vld [vmem:[#allocation3] sm:$0xff]
    %v82 = vld [vmem:[#allocation3 + $0x8] sm:$0xff]
    %v83 = vld [vmem:[#allocation3 + $0x10] sm:$0xff]
    %v84 = vld [vmem:[#allocation3 + $0x18] sm:$0xff]
    %v85 = vmax.f32 %v41, %v42
    %v86 = vmax.f32 %v45, %v46
    %v87 = vmax.f32 %v49, %v50
    %v88 = vmax.f32 %v53, %v54
    %v89 = vmax.f32 %v43, %v44
    %v90 = vmax.f32 %v47, %v48
    %v91 = vmax.f32 %v51, %v52
    %v92 = vmax.f32 %v55, %v56
    %v93 = vmax.f32 %v85, %v89
    %v94 = vmax.f32 %v86, %v90
    %v95 = vmax.f32 %v87, %v91
    %v96 = vmax.f32 %v88, %v92
    %v97 = vmax.f32 %v81, %v93
    %v98 = vmax.f32 %v82, %v94
    %v99 = vmax.f32 %v83, %v95
    %v100 = vmax.f32 %v84, %v96
    %101 = vst [vmem:[#allocation3] sm:$0xff] %v97
    %102 = vst [vmem:[#allocation3 + $0x8] sm:$0xff] %v98
    %103 = vst [vmem:[#allocation3 + $0x10] sm:$0xff] %v99
    %104 = vst [vmem:[#allocation3 + $0x18] sm:$0xff] %v100
    // Predicated region
    $region22: #{tpu_custom_call.1} parent=1 // pred_check
      %p105 = pneg %p29
    $region23: #{tpu_custom_call.1} parent=1 // pred_check_branch
      %107 = sbr.rel (%p105) target = $region25
    $region24: #{tpu_custom_call.1} parent=1 // pred_region
      %v108 = vld [vmem:[#allocation2] sm:$0xff]
      %v109 = vld [vmem:[#allocation2 + $0x8] sm:$0xff]
      %v110 = vld [vmem:[#allocation2 + $0x10] sm:$0xff]
      %v111 = vld [vmem:[#allocation2 + $0x18] sm:$0xff]
      %112 = vadd.xlane.f32.xlu0 %v108
      %v113 = vpop.xlane.xlu0 %112
      %114 = vadd.xlane.f32.xlu0 %v109
      %v115 = vpop.xlane.xlu0 %114
      %116 = vadd.xlane.f32.xlu0 %v110
      %v117 = vpop.xlane.xlu0 %116
      %118 = vadd.xlane.f32.xlu0 %v111
      %v119 = vpop.xlane.xlu0 %118
      %v120 = vmul.f32 %v113, 0.001953125
      %v121 = vmul.f32 %v115, 0.001953125
      %v122 = vmul.f32 %v117, 0.001953125
      %v123 = vmul.f32 %v119, 0.001953125
      %v124 = vld [vmem:[#allocation3] sm:$0xff]
      %v125 = vld [vmem:[#allocation3 + $0x8] sm:$0xff]
      %v126 = vld [vmem:[#allocation3 + $0x10] sm:$0xff]
      %v127 = vld [vmem:[#allocation3 + $0x18] sm:$0xff]
      %128 = vmax.xlane.f32.xlu0 %v124
      %v129 = vpop.xlane.xlu0 %128
      %130 = vmax.xlane.f32.xlu0 %v125
      %v131 = vpop.xlane.xlu0 %130
      %132 = vmax.xlane.f32.xlu0 %v126
      %v133 = vpop.xlane.xlu0 %132
      %134 = vmax.xlane.f32.xlu0 %v127
      %v135 = vpop.xlane.xlu0 %134
      %v136 = vld [vmem:[%s1] sm:$0xff]
      %v137 = vld [vmem:[%s1 + $0x8] sm:$0xff]
      %v138 = vld [vmem:[%s2] sm:$0xf]
      %v143 = vlaneseq
      %v144 = vand.u32 %v143, 127
      %v145 = vlaneseq
      %v146 = vshrl.u32 %v145, 7
      %v147 = vsub.s32 %v144, %v146
      %v148 = vrot.slane %v120, %v147
      %v149 = vadd.s32 %v144, 4294967288
      %v150 = vlaneseq
      %v151 = vshrl.u32 %v150, 7
      %v152 = vsub.s32 %v149, %v151
      %v153 = vrot.slane %v121, %v152
      %vm154 = vcmask 130112
      %v155 = vsel %vm154, %v153, %v148
      %v156 = vlaneseq
      %v157 = vshrl.u32 %v156, 7
      %v158 = vsub.s32 %v144, %v157
      %v159 = vrot.slane %v122, %v158
      %v160 = vlaneseq
      %v161 = vshrl.u32 %v160, 7
      %v162 = vsub.s32 %v149, %v161
      %v163 = vrot.slane %v123, %v162
      %v164 = vsel %vm154, %v163, %v159
      %vm165 = vcmask 1041409
      %v166 = vsel %vm165, %v164, %v155
      %vm167 = vcmask 130048
      %v168 = vsel %vm167, %v166, 0
      %170 = vmatprep.subr.mxu0 0.0
      %171 = vmatpush1.msra.mxu0 %v136
      %172 = vmatprep.subr.mxu0 0.0
      %173 = vmatpush1.msra.mxu0 %v137
      %174 = vmatprep.subr.mxu0 0.0
      %175 = vmatpush1.msra.mxu0 0.0
      %176 = vmatprep.subr.mxu0 0.0
      %177 = vmatpush1.msra.mxu0 0.0
      %178 = vmatprep.subr.mxu0 0.0
      %179 = vmatpush1.msra.mxu0 0.0
      %180 = vmatprep.subr.mxu0 0.0
      %181 = vmatpush1.msra.mxu0 0.0
      %182 = vmatprep.subr.mxu0 0.0
      %183 = vmatpush1.msra.mxu0 0.0
      %184 = vmatprep.subr.mxu0 0.0
      %185 = vmatpush1.msra.mxu0 0.0
      %186 = vmatprep.subr.mxu0 0.0
      %187 = vmatpush1.msra.mxu0 0.0
      %188 = vmatprep.subr.mxu0 0.0
      %189 = vmatpush1.msra.mxu0 0.0
      %190 = vmatprep.subr.mxu0 0.0
      %191 = vmatpush1.msra.mxu0 0.0
      %192 = vmatprep.subr.mxu0 0.0
      %193 = vmatpush1.msra.mxu0 0.0
      %194 = vmatprep.subr.mxu0 0.0
      %195 = vmatpush1.msra.mxu0 0.0
      %196 = vmatprep.subr.mxu0 0.0
      %197 = vmatpush1.msra.mxu0 0.0
      %198 = vmatprep.subr.mxu0 0.0
      %199 = vmatpush1.msra.mxu0 0.0
      %200 = vmatprep.subr.mxu0 0.0
      %201 = vmatpush1.msra.mxu0 0.0
      %202 = vmatprep.subr.mxu0 0.0
      %203 = vmatpush1.msra.mxu0 0.0
      %204 = vmatprep.subr.mxu0 0.0
      %205 = vmatpush1.msra.mxu0 0.0
      %206 = vmatprep.subr.mxu0 0.0
      %207 = vmatpush1.msra.mxu0 0.0
      %208 = vmatprep.subr.mxu0 0.0
      %209 = vmatpush1.msra.mxu0 0.0
      %210 = vmatprep.subr.mxu0 0.0
      %211 = vmatpush1.msra.mxu0 0.0
      %212 = vmatprep.subr.mxu0 0.0
      %213 = vmatpush1.msra.mxu0 0.0
      %214 = vmatprep.subr.mxu0 0.0
      %215 = vmatpush1.msra.mxu0 0.0
      %216 = vmatprep.subr.mxu0 0.0
      %217 = vmatpush1.msra.mxu0 0.0
      %218 = vmatprep.subr.mxu0 0.0
      %219 = vmatpush1.msra.mxu0 0.0
      %220 = vmatprep.subr.mxu0 0.0
      %221 = vmatpush1.msra.mxu0 0.0
      %222 = vmatprep.subr.mxu0 0.0
      %223 = vmatpush1.msra.mxu0 0.0
      %224 = vmatprep.subr.mxu0 0.0
      %225 = vmatpush1.msra.mxu0 0.0
      %226 = vmatprep.subr.mxu0 0.0
      %227 = vmatpush1.msra.mxu0 0.0
      %228 = vmatprep.subr.mxu0 0.0
      %229 = vmatpush1.msra.mxu0 0.0
      %230 = vmatprep.subr.mxu0 0.0
      %231 = vmatpush1.msra.mxu0 0.0
      %232 = vmatprep.subr.mxu0 0.0
      %233 = vmatpush1.msra.mxu0 0.0
      %234 = vmatprep.mubr.f32.mxu0 0.0
      %235 = vmatmul.mubr.f32.gmra.mrb[0].mxu0 %v168
      %v236 = vpop.f32.mrb[0].mxu0
      %v237 = vadd.f32 0.0, %v236
      %v238 = vpop.f32.mrb[0].mxu0
      %239 = vdwg.mxu0
      %v240 = vmax.f32 %v237, 0.0
      %v245 = vlaneseq
      %v246 = vshrl.u32 %v245, 7
      %v247 = vsub.s32 %v144, %v246
      %v248 = vrot.slane %v129, %v247
      %v249 = vlaneseq
      %v250 = vshrl.u32 %v249, 7
      %v251 = vsub.s32 %v149, %v250
      %v252 = vrot.slane %v131, %v251
      %v253 = vsel %vm154, %v252, %v248
      %v254 = vlaneseq
      %v255 = vshrl.u32 %v254, 7
      %v256 = vsub.s32 %v144, %v255
      %v257 = vrot.slane %v133, %v256
      %v258 = vlaneseq
      %v259 = vshrl.u32 %v258, 7
      %v260 = vsub.s32 %v149, %v259
      %v261 = vrot.slane %v135, %v260
      %v262 = vsel %vm154, %v261, %v257
      %v263 = vsel %vm165, %v262, %v253
      %v264 = vsel %vm167, %v263, 0
      %266 = vmatprep.subr.mxu0 0.0
      %267 = vmatpush1.msra.mxu0 %v136
      %268 = vmatprep.subr.mxu0 0.0
      %269 = vmatpush1.msra.mxu0 %v137
      %270 = vmatprep.subr.mxu0 0.0
      %271 = vmatpush1.msra.mxu0 0.0
      %272 = vmatprep.subr.mxu0 0.0
      %273 = vmatpush1.msra.mxu0 0.0
      %274 = vmatprep.subr.mxu0 0.0
      %275 = vmatpush1.msra.mxu0 0.0
      %276 = vmatprep.subr.mxu0 0.0
      %277 = vmatpush1.msra.mxu0 0.0
      %278 = vmatprep.subr.mxu0 0.0
      %279 = vmatpush1.msra.mxu0 0.0
      %280 = vmatprep.subr.mxu0 0.0
      %281 = vmatpush1.msra.mxu0 0.0
      %282 = vmatprep.subr.mxu0 0.0
      %283 = vmatpush1.msra.mxu0 0.0
      %284 = vmatprep.subr.mxu0 0.0
      %285 = vmatpush1.msra.mxu0 0.0
      %286 = vmatprep.subr.mxu0 0.0
      %287 = vmatpush1.msra.mxu0 0.0
      %288 = vmatprep.subr.mxu0 0.0
      %289 = vmatpush1.msra.mxu0 0.0
      %290 = vmatprep.subr.mxu0 0.0
      %291 = vmatpush1.msra.mxu0 0.0
      %292 = vmatprep.subr.mxu0 0.0
      %293 = vmatpush1.msra.mxu0 0.0
      %294 = vmatprep.subr.mxu0 0.0
      %295 = vmatpush1.msra.mxu0 0.0
      %296 = vmatprep.subr.mxu0 0.0
      %297 = vmatpush1.msra.mxu0 0.0
      %298 = vmatprep.subr.mxu0 0.0
      %299 = vmatpush1.msra.mxu0 0.0
      %300 = vmatprep.subr.mxu0 0.0
      %301 = vmatpush1.msra.mxu0 0.0
      %302 = vmatprep.subr.mxu0 0.0
      %303 = vmatpush1.msra.mxu0 0.0
      %304 = vmatprep.subr.mxu0 0.0
      %305 = vmatpush1.msra.mxu0 0.0
      %306 = vmatprep.subr.mxu0 0.0
      %307 = vmatpush1.msra.mxu0 0.0
      %308 = vmatprep.subr.mxu0 0.0
      %309 = vmatpush1.msra.mxu0 0.0
      %310 = vmatprep.subr.mxu0 0.0
      %311 = vmatpush1.msra.mxu0 0.0
      %312 = vmatprep.subr.mxu0 0.0
      %313 = vmatpush1.msra.mxu0 0.0
      %314 = vmatprep.subr.mxu0 0.0
      %315 = vmatpush1.msra.mxu0 0.0
      %316 = vmatprep.subr.mxu0 0.0
      %317 = vmatpush1.msra.mxu0 0.0
      %318 = vmatprep.subr.mxu0 0.0
      %319 = vmatpush1.msra.mxu0 0.0
      %320 = vmatprep.subr.mxu0 0.0
      %321 = vmatpush1.msra.mxu0 0.0
      %322 = vmatprep.subr.mxu0 0.0
      %323 = vmatpush1.msra.mxu0 0.0
      %324 = vmatprep.subr.mxu0 0.0
      %325 = vmatpush1.msra.mxu0 0.0
      %326 = vmatprep.subr.mxu0 0.0
      %327 = vmatpush1.msra.mxu0 0.0
      %328 = vmatprep.subr.mxu0 0.0
      %329 = vmatpush1.msra.mxu0 0.0
      %330 = vmatprep.mubr.f32.mxu0 0.0
      %331 = vmatmul.mubr.f32.gmra.mrb[0].mxu0 %v264
      %v332 = vpop.f32.mrb[0].mxu0
      %v333 = vadd.f32 0.0, %v332
      %v334 = vpop.f32.mrb[0].mxu0
      %335 = vdwg.mxu0
      %v336 = vmax.f32 %v333, 0.0
      %v337 = vadd.f32 %v240, %v336
      %vm338 = vcmask 31744
      %v340 = vsel %vm338, %v337, 0
      %vm342 = vcmask 1043456
      %v344 = vsel %vm342, %v138, 0
      %346 = vmatprep.subr.mxu0 0.0
      %347 = vmatpush1.msra.mxu0 %v344
      %348 = vmatprep.subr.mxu0 0.0
      %349 = vmatpush1.msra.mxu0 0.0
      %350 = vmatprep.subr.mxu0 0.0
      %351 = vmatpush1.msra.mxu0 0.0
      %352 = vmatprep.subr.mxu0 0.0
      %353 = vmatpush1.msra.mxu0 0.0
      %354 = vmatprep.subr.mxu0 0.0
      %355 = vmatpush1.msra.mxu0 0.0
      %356 = vmatprep.subr.mxu0 0.0
      %357 = vmatpush1.msra.mxu0 0.0
      %358 = vmatprep.subr.mxu0 0.0
      %359 = vmatpush1.msra.mxu0 0.0
      %360 = vmatprep.subr.mxu0 0.0
      %361 = vmatpush1.msra.mxu0 0.0
      %362 = vmatprep.subr.mxu0 0.0
      %363 = vmatpush1.msra.mxu0 0.0
      %364 = vmatprep.subr.mxu0 0.0
      %365 = vmatpush1.msra.mxu0 0.0
      %366 = vmatprep.subr.mxu0 0.0
      %367 = vmatpush1.msra.mxu0 0.0
      %368 = vmatprep.subr.mxu0 0.0
      %369 = vmatpush1.msra.mxu0 0.0
      %370 = vmatprep.subr.mxu0 0.0
      %371 = vmatpush1.msra.mxu0 0.0
      %372 = vmatprep.subr.mxu0 0.0
      %373 = vmatpush1.msra.mxu0 0.0
      %374 = vmatprep.subr.mxu0 0.0
      %375 = vmatpush1.msra.mxu0 0.0
      %376 = vmatprep.subr.mxu0 0.0
      %377 = vmatpush1.msra.mxu0 0.0
      %378 = vmatprep.subr.mxu0 0.0
      %379 = vmatpush1.msra.mxu0 0.0
      %380 = vmatprep.subr.mxu0 0.0
      %381 = vmatpush1.msra.mxu0 0.0
      %382 = vmatprep.subr.mxu0 0.0
      %383 = vmatpush1.msra.mxu0 0.0
      %384 = vmatprep.subr.mxu0 0.0
      %385 = vmatpush1.msra.mxu0 0.0
      %386 = vmatprep.subr.mxu0 0.0
      %387 = vmatpush1.msra.mxu0 0.0
      %388 = vmatprep.subr.mxu0 0.0
      %389 = vmatpush1.msra.mxu0 0.0
      %390 = vmatprep.subr.mxu0 0.0
      %391 = vmatpush1.msra.mxu0 0.0
      %392 = vmatprep.subr.mxu0 0.0
      %393 = vmatpush1.msra.mxu0 0.0
      %394 = vmatprep.subr.mxu0 0.0
      %395 = vmatpush1.msra.mxu0 0.0
      %396 = vmatprep.subr.mxu0 0.0
      %397 = vmatpush1.msra.mxu0 0.0
      %398 = vmatprep.subr.mxu0 0.0
      %399 = vmatpush1.msra.mxu0 0.0
      %400 = vmatprep.subr.mxu0 0.0
      %401 = vmatpush1.msra.mxu0 0.0
      %402 = vmatprep.subr.mxu0 0.0
      %403 = vmatpush1.msra.mxu0 0.0
      %404 = vmatprep.subr.mxu0 0.0
      %405 = vmatpush1.msra.mxu0 0.0
      %406 = vmatprep.subr.mxu0 0.0
      %407 = vmatpush1.msra.mxu0 0.0
      %408 = vmatprep.subr.mxu0 0.0
      %409 = vmatpush1.msra.mxu0 0.0
      %410 = vmatprep.mubr.f32.mxu0 0.0
      %411 = vmatmul.mubr.f32.gmra.mrb[0].mxu0 %v340
      %v412 = vpop.f32.mrb[0].mxu0
      %v413 = vadd.f32 0.0, %v412
      %v414 = vpop.f32.mrb[0].mxu0
      %415 = vdwg.mxu0
      %v416 = vxor.u32 %v413, 2147483648
      %v417 = vmul.f32 %v416, 1.442695
      %v418 = vpow.pop %v417
      %v419 = vadd.f32 %v418, 1.0
      %v420 = vrcp.pop %v419
      %v421 = vmul.f32 1.0, %v420
      %vm422 = vcmask 123904
      %423 = vst.msk [vmem:[#allocation7] sm:$0x3] %vm422, %v421
    $region25: #{tpu_custom_call.1} parent=1 // pred_fallthru
      _
    // Predicated region
    $region26: #{tpu_custom_call.1} parent=1 // pred_check
      _
    $region27: #{tpu_custom_call.1} parent=1 // pred_check_branch
      %425 = sbr.rel (0) target = $region29
    $region28: #{tpu_custom_call.1} parent=1 // pred_region
      %s427 = ssub.s32 32, 32
      %428 = vsyncadd [#allocation6], %s427
      %s430 = sshll.u32 [#allocation7], 4
      %s431 = int_to_ptr.vmem [resolvable:$true] %s430
      %433 = dma.vmem_to_hbm [thread:$0]  %s431, 32, %s3, [#allocation6]
    $region29: #{tpu_custom_call.1} parent=1 // pred_fallthru
      _
    // Predicated region
    $region30: #{tpu_custom_call.1} parent=1 // pred_check
      _
    $region31: #{tpu_custom_call.1} parent=1 // pred_check_branch
      %435 = sbr.rel (0) target = $region33
    $region32: #{tpu_custom_call.1} parent=1 // pred_region
      %436 = dma.done [#allocation6], 32
    $region33: #{tpu_custom_call.1} parent=1 // pred_fallthru
      _
    %437 = vsyncpa [#allocation5], 1
    %438 = vsyncpa [#allocation6], 1

</llo_original>
